<compile_context>
chip_gen: v6e
topology: v6e:2x2x1
jax: 0.10.0
libtpu: 0.0.40
codegen_flags: <defaults>
</compile_context>

<pallas_src>
import functools
import math

import jax
import jax.numpy as jnp
from jax.experimental import pallas as pl
from jax.experimental.pallas import tpu as pltpu

EPS = 1e-5


def _round_up(v, m):
    return (v + m - 1) // m * m


def _tpu_tile_plan():
    """Chip-dependent tile caps / VMEM limit. Conservative fallback if query fails."""
    try:
        vmem = int(pltpu.get_tpu_info().vmem_capacity_bytes)
    except Exception:  # unknown chip / query unavailable -> conservative settings
        vmem = 0
    if vmem >= 96 * 1024 * 1024:
        # v5e / v6e: 128 MiB VMEM, single TensorCore -> large tiles, no N split.
        # (4096x4096 bf16 W tile = 32 MiB; 64 MiB double-buffered fits under 96 MiB.)
        return dict(tk_max=4096, tn_max=4096, vmem_limit=96 * 1024 * 1024, split_n=False)
    # v7x (64 MiB/TC, 2 TCs) or unknown: 2048 tiles (8 MiB W tile, 16 MiB double-
    # buffered), and split N so the "parallel" axis feeds both TensorCores.
    return dict(tk_max=2048, tn_max=2048, vmem_limit=48 * 1024 * 1024, split_n=True)


def _plan_layer(k_dim, n_dim):
    """Pick (tk, tn, k_p, n_p, vmem_limit) for a (k_dim -> n_dim) linear layer."""
    plan = _tpu_tile_plan()
    tk = min(plan["tk_max"], _round_up(k_dim, 128))
    tn = min(plan["tn_max"], _round_up(n_dim, 128))
    if plan["split_n"]:
        # Guarantee >=2 N tiles when possible (v7x: one tile per TensorCore).
        while _round_up(n_dim, tn) // tn < 2 and tn > 128:
            tn = _round_up(tn // 2, 128)
    k_p = _round_up(k_dim, tk)
    n_p = _round_up(n_dim, tn)
    return tk, tn, k_p, n_p, plan["vmem_limit"]


def _clneck_layer_kernel(x_ref, w_ref, b_ref, g_ref, beta_ref, o_ref, *, b_real):
    """One (n, k) grid step: accumulate relu(x_k) @ W_{k,n} into o_ref; bias+BN at last k."""
    k = pl.program_id(1)

    @pl.when(k == 0)
    def _init():
        o_ref[...] = jnp.zeros_like(o_ref)

    # relu on the layer input (module order: relu -> fc -> bn). x tile is tiny, so
    # relu in f32 is free; the MXU operands are bf16 x bf16 with f32 accumulation.
    x = jnp.maximum(x_ref[...], 0.0).astype(jnp.bfloat16)
    o_ref[...] += jnp.dot(x, w_ref[...], preferred_element_type=jnp.float32)

    @pl.when(k == pl.num_programs(1) - 1)
    def _finalize():
        y = o_ref[...] + b_ref[...]
        # BatchNorm1d (training mode): per-feature stats over the REAL batch rows
        # only (batch is sublane-padded to a multiple of 8 in the wrapper).
        row_ids = jax.lax.broadcasted_iota(jnp.int32, y.shape, 0)
        valid = (row_ids < b_real).astype(jnp.float32)
        inv_b = 1.0 / float(b_real)
        mean = jnp.sum(y * valid, axis=0, keepdims=True) * inv_b
        d = (y - mean) * valid
        var = jnp.sum(d * d, axis=0, keepdims=True) * inv_b
        y_hat = (y - mean) * jax.lax.rsqrt(var + EPS)
        o_ref[...] = (y_hat * g_ref[...] + beta_ref[...]).astype(o_ref.dtype)


def _run_layer(x, layer, *, b_real):
    """x: (B_pad, k_dim) f32 activation -> (B_pad, n_dim) f32. Params are pre-padded."""
    w, b, gamma, beta = layer["w"], layer["b"], layer["gamma"], layer["beta"]
    k_dim, n_dim = layer["k_dim"], layer["n_dim"]
    tk, tn = layer["tk"], layer["tn"]
    vmem_limit = layer["vmem_limit"]
    k_p, n_p = w.shape
    b_pad = x.shape[0]
    assert x.shape[1] == k_dim

    # Only the tiny activation is padded per call (zero pad is a no-op: relu(0)=0
    # and the padded W rows are zero).
    if k_p != k_dim:
        x = jnp.pad(x, ((0, 0), (0, k_p - k_dim)))

    grid = (n_p // tn, k_p // tk)  # (N tiles, K tiles); K (reduction) last.

    out = pl.pallas_call(
        functools.partial(_clneck_layer_kernel, b_real=b_real),
        out_shape=jax.ShapeDtypeStruct((b_pad, n_p), jnp.float32),
        grid_spec=pltpu.PrefetchScalarGridSpec(
            num_scalar_prefetch=0,
            grid=grid,
            in_specs=[
                pl.BlockSpec((b_pad, tk), lambda n, k: (0, k)),   # x: full batch, K tile
                pl.BlockSpec((tk, tn), lambda n, k: (k, n)),      # W: streamed bf16 tile
                pl.BlockSpec((1, tn), lambda n, k: (0, n)),       # bias
                pl.BlockSpec((1, tn), lambda n, k: (0, n)),       # gamma
                pl.BlockSpec((1, tn), lambda n, k: (0, n)),       # beta
            ],
            out_specs=pl.BlockSpec((b_pad, tn), lambda n, k: (0, n)),  # resident across k
        ),
        compiler_params=pltpu.CompilerParams(
            dimension_semantics=("parallel", "arbitrary"),
            vmem_limit_bytes=vmem_limit,
        ),
    )(x, w, b, gamma, beta)

    if n_p != n_dim:
        out = out[:, :n_dim]
    return out


def init_clneck_params(key, seq_len, embed_size, num_layer=1):
    """Mirror CLNeck.__init__; weights stored transposed (in_dim, hidden) in bf16,
    pre-padded to the kernel tile grid (pad once here, not in the hot forward)."""
    input_dim = seq_len * embed_size
    params = []
    for i in range(num_layer):
        hidden_dim = input_dim if i < num_layer - 1 else embed_size
        tk, tn, k_p, n_p, vmem_limit = _plan_layer(input_dim, hidden_dim)

        key, kw, kb = jax.random.split(key, 3)
        bound = 1.0 / math.sqrt(input_dim)
        w = jax.random.uniform(kw, (input_dim, hidden_dim), jnp.float32, -bound, bound)
        b = jax.random.uniform(kb, (1, hidden_dim), jnp.float32, -bound, bound)
        gamma = jnp.ones((1, hidden_dim), jnp.float32)
        beta = jnp.zeros((1, hidden_dim), jnp.float32)

        # bf16 weights halve the HBM bytes of the mem-bound streamed operand.
        w_pad = jnp.zeros((k_p, n_p), jnp.bfloat16).at[:input_dim, :hidden_dim].set(
            w.astype(jnp.bfloat16))
        b_pad = jnp.zeros((1, n_p), jnp.float32).at[:, :hidden_dim].set(b)
        g_pad = jnp.zeros((1, n_p), jnp.float32).at[:, :hidden_dim].set(gamma)
        beta_pad = jnp.zeros((1, n_p), jnp.float32).at[:, :hidden_dim].set(beta)

        params.append(dict(w=w_pad, b=b_pad, gamma=g_pad, beta=beta_pad,
                           k_dim=input_dim, n_dim=hidden_dim,
                           tk=tk, tn=tn, vmem_limit=vmem_limit))
    return params


def clneck_forward(x, params):
    """x: (B, L, D) -> (B, embed_size). Flatten/pad is glue; the hot path is Pallas."""
    B = x.shape[0]
    b_pad = _round_up(B, 8)                      # sublane-align the batch (keep at 8)
    h = jnp.reshape(x, (B, -1))
    if b_pad != B:
        h = jnp.pad(h, ((0, b_pad - B), (0, 0)))
    for layer in params:
        assert h.shape[-1] == layer["k_dim"]
        h = _run_layer(h, layer, b_real=B)
    return h[:B]


def _reference_forward(x, params):
    """Pure-JAX reference mirroring the kernel compute (bf16 x bf16 MXU, f32 acc)."""
    B = x.shape[0]
    h = jnp.reshape(x, (B, -1)).astype(jnp.float32)
    for layer in params:
        k_dim, n_dim = layer["k_dim"], layer["n_dim"]
        w = layer["w"][:k_dim, :n_dim]                 # bf16, exactly as streamed
        b = layer["b"][:, :n_dim]
        gamma = layer["gamma"][:, :n_dim]
        beta = layer["beta"][:, :n_dim]
        h_bf = jnp.maximum(h, 0.0).astype(jnp.bfloat16)
        h = jnp.dot(h_bf, w, preferred_element_type=jnp.float32) + b
        mean = jnp.mean(h, axis=0, keepdims=True)
        var = jnp.mean((h - mean) ** 2, axis=0, keepdims=True)
        h = gamma * (h - mean) / jnp.sqrt(var + EPS) + beta
    return h


if __name__ == "__main__":
    seq_len, embed_size = 8, 32
    B = 4

    key = jax.random.PRNGKey(0)
    key, kx = jax.random.split(key)
    x = jax.random.normal(kx, (B, seq_len, embed_size), jnp.float32)

    # num_layer=1 (default head) and num_layer=2 (exercises the (in_dim, in_dim)
    # hidden weight, the N-tile split, and the cross-layer path).
    for num_layer in (1, 2):
        kp = jax.random.fold_in(key, num_layer)
        params = init_clneck_params(kp, seq_len, embed_size, num_layer)

        out = jax.block_until_ready(clneck_forward(x, params))
        ref = _reference_forward(x, params)

        assert out.shape == (B, embed_size), out.shape
        max_err = float(jnp.max(jnp.abs(out - ref)))
        assert jnp.allclose(out, ref, atol=2e-3, rtol=2e-3), (
            f"mismatch vs reference (num_layer={num_layer}), max_err={max_err}")

    print("KERNEL_OK")
</pallas_src>

<mosaic_0001>
module attributes {stable_mosaic.version = 11 : i64} {
  func.func @_clneck_layer_kernel(%arg0: i32, %arg1: i32, %arg2: memref<8x256xf32, #tpu.memory_space<vmem>>, %arg3: memref<256x128xbf16, #tpu.memory_space<vmem>>, %arg4: memref<1x128xf32, #tpu.memory_space<vmem>>, %arg5: memref<1x128xf32, #tpu.memory_space<vmem>>, %arg6: memref<1x128xf32, #tpu.memory_space<vmem>>, %arg7: memref<8x128xf32, #tpu.memory_space<vmem>>) attributes {dimension_semantics = [#tpu.dimension_semantics<parallel>, #tpu.dimension_semantics<arbitrary>], iteration_bounds = array<i64: 1, 1>, scalar_prefetch = 0 : i64, scratch_operands = 0 : i64, tpu.core_type = #tpu.core_type<tc>, window_params = [{transform_indices = @transform_0, window_bounds = array<i64: 8, 256>}, {transform_indices = @transform_1, window_bounds = array<i64: 256, 128>}, {transform_indices = @transform_2, window_bounds = array<i64: 1, 128>}, {transform_indices = @transform_3, window_bounds = array<i64: 1, 128>}, {transform_indices = @transform_4, window_bounds = array<i64: 1, 128>}, {transform_indices = @transform_5, window_bounds = array<i64: 8, 128>}]} {
    %c0_i32 = arith.constant 0 : i32
    %0 = arith.cmpi eq, %arg1, %c0_i32 : i32
    %1 = arith.extui %0 : i1 to i32
    %c0_i32_0 = arith.constant 0 : i32
    %2 = arith.cmpi ne, %1, %c0_i32_0 : i32
    scf.if %2 {
      %cst_11 = arith.constant 0.000000e+00 : f32
      %15 = vector.broadcast %cst_11 : f32 to vector<8x128xf32>
      %c0_12 = arith.constant 0 : index
      %c0_13 = arith.constant 0 : index
      %16 = vector.load %arg7[%c0_12, %c0_13] : memref<8x128xf32, #tpu.memory_space<vmem>>, vector<8x128xf32>
      tpu.vector_store %arg7[%c0_12, %c0_13], %15 {strides = array<i32>} : memref<8x128xf32, #tpu.memory_space<vmem>>, vector<8x128xf32>,
    } else {
    }
    %c0 = arith.constant 0 : index
    %c0_1 = arith.constant 0 : index
    %3 = vector.load %arg2[%c0, %c0_1] : memref<8x256xf32, #tpu.memory_space<vmem>>, vector<8x256xf32>
    %cst = arith.constant 0.000000e+00 : f32
    %4 = vector.broadcast %cst : f32 to vector<8x256xf32>
    %5 = arith.maximumf %3, %4 : vector<8x256xf32>
    %6 = arith.truncf %5 : vector<8x256xf32> to vector<8x256xbf16>
    %c0_2 = arith.constant 0 : index
    %c0_3 = arith.constant 0 : index
    %7 = vector.load %arg7[%c0_2, %c0_3] : memref<8x128xf32, #tpu.memory_space<vmem>>, vector<8x128xf32>
    %c0_4 = arith.constant 0 : index
    %c0_5 = arith.constant 0 : index
    %8 = vector.load %arg3[%c0_4, %c0_5] : memref<256x128xbf16, #tpu.memory_space<vmem>>, vector<256x128xbf16>
    %cst_6 = arith.constant dense<0.000000e+00> : vector<8x128xf32>
    %9 = tpu.matmul %6, %8, %cst_6 {dimension_numbers = #tpu.dot_dimension_numbers<[1], [0], [0], [1], [0, 0, 1, 1], [], []>} : vector<8x256xbf16>, vector<256x128xbf16>, vector<8x128xf32> -> vector<8x128xf32>
    %10 = arith.addf %7, %9 : vector<8x128xf32>
    %c0_7 = arith.constant 0 : index
    %c0_8 = arith.constant 0 : index
    %11 = vector.load %arg7[%c0_7, %c0_8] : memref<8x128xf32, #tpu.memory_space<vmem>>, vector<8x128xf32>
    tpu.vector_store %arg7[%c0_7, %c0_8], %10 {strides = array<i32>} : memref<8x128xf32, #tpu.memory_space<vmem>>, vector<8x128xf32>,
    %c0_i32_9 = arith.constant 0 : i32
    %12 = arith.cmpi eq, %arg1, %c0_i32_9 : i32
    %13 = arith.extui %12 : i1 to i32
    %c0_i32_10 = arith.constant 0 : i32
    %14 = arith.cmpi ne, %13, %c0_i32_10 : i32
    scf.if %14 {
      %c0_11 = arith.constant 0 : index
      %c0_12 = arith.constant 0 : index
      %15 = vector.load %arg7[%c0_11, %c0_12] : memref<8x128xf32, #tpu.memory_space<vmem>>, vector<8x128xf32>
      %c0_13 = arith.constant 0 : index
      %c0_14 = arith.constant 0 : index
      %16 = vector.load %arg4[%c0_13, %c0_14] : memref<1x128xf32, #tpu.memory_space<vmem>>, vector<1x128xf32>
      %17 = vector.broadcast %16 : vector<1x128xf32> to vector<8x128xf32>
      %18 = arith.addf %15, %17 : vector<8x128xf32>
      %19 = tpu.iota {dimensions = array<i32: 0>} : vector<8x128xi32>
      %c4_i32 = arith.constant 4 : i32
      %20 = vector.broadcast %c4_i32 : i32 to vector<8x128xi32>
      %21 = arith.cmpi slt, %19, %20 : vector<8x128xi32>
      %22 = arith.extui %21 : vector<8x128xi1> to vector<8x128xi32>
      %23 = arith.sitofp %22 : vector<8x128xi32> to vector<8x128xf32>
      %24 = arith.mulf %18, %23 : vector<8x128xf32>
      %cst_15 = arith.constant dense<0.000000e+00> : vector<128xf32>
      %25 = vector.multi_reduction <add>, %24, %cst_15 [0] : vector<8x128xf32> to vector<128xf32>
      %26 = vector.shape_cast %25 : vector<128xf32> to vector<1x128xf32>
      %cst_16 = arith.constant 2.500000e-01 : f32
      %27 = vector.broadcast %cst_16 : f32 to vector<1x128xf32>
      %28 = arith.mulf %26, %27 : vector<1x128xf32>
      %29 = vector.broadcast %28 : vector<1x128xf32> to vector<8x128xf32>
      %30 = arith.subf %18, %29 : vector<8x128xf32>
      %31 = arith.mulf %30, %23 : vector<8x128xf32>
      %32 = arith.mulf %31, %31 : vector<8x128xf32>
      %cst_17 = arith.constant dense<0.000000e+00> : vector<128xf32>
      %33 = vector.multi_reduction <add>, %32, %cst_17 [0] : vector<8x128xf32> to vector<128xf32>
      %34 = vector.shape_cast %33 : vector<128xf32> to vector<1x128xf32>
      %cst_18 = arith.constant 2.500000e-01 : f32
      %35 = vector.broadcast %cst_18 : f32 to vector<1x128xf32>
      %36 = arith.mulf %34, %35 : vector<1x128xf32>
      %37 = vector.broadcast %28 : vector<1x128xf32> to vector<8x128xf32>
      %38 = arith.subf %18, %37 : vector<8x128xf32>
      %cst_19 = arith.constant 9.99999974E-6 : f32
      %39 = vector.broadcast %cst_19 : f32 to vector<1x128xf32>
      %40 = arith.addf %36, %39 : vector<1x128xf32>
      %41 = math.rsqrt %40 : vector<1x128xf32>
      %42 = vector.broadcast %41 : vector<1x128xf32> to vector<8x128xf32>
      %43 = arith.mulf %38, %42 : vector<8x128xf32>
      %c0_20 = arith.constant 0 : index
      %c0_21 = arith.constant 0 : index
      %44 = vector.load %arg5[%c0_20, %c0_21] : memref<1x128xf32, #tpu.memory_space<vmem>>, vector<1x128xf32>
      %45 = vector.broadcast %44 : vector<1x128xf32> to vector<8x128xf32>
      %46 = arith.mulf %43, %45 : vector<8x128xf32>
      %c0_22 = arith.constant 0 : index
      %c0_23 = arith.constant 0 : index
      %47 = vector.load %arg6[%c0_22, %c0_23] : memref<1x128xf32, #tpu.memory_space<vmem>>, vector<1x128xf32>
      %48 = vector.broadcast %47 : vector<1x128xf32> to vector<8x128xf32>
      %49 = arith.addf %46, %48 : vector<8x128xf32>
      %c0_24 = arith.constant 0 : index
      %c0_25 = arith.constant 0 : index
      %50 = vector.load %arg7[%c0_24, %c0_25] : memref<8x128xf32, #tpu.memory_space<vmem>>, vector<8x128xf32>
      tpu.vector_store %arg7[%c0_24, %c0_25], %49 {strides = array<i32>} : memref<8x128xf32, #tpu.memory_space<vmem>>, vector<8x128xf32>,
    } else {
    }
    return
  }
  func.func @transform_0(%arg0: i32, %arg1: i32) -> (i32, i32) {
    %c0_i32 = arith.constant 0 : i32
    %c0_i32_0 = arith.constant 0 : i32
    return %c0_i32, %arg1 : i32, i32
  }
  func.func @transform_1(%arg0: i32, %arg1: i32) -> (i32, i32) {
    %c0_i32 = arith.constant 0 : i32
    return %arg1, %arg0 : i32, i32
  }
  func.func @transform_2(%arg0: i32, %arg1: i32) -> (i32, i32) {
    %c0_i32 = arith.constant 0 : i32
    %c0_i32_0 = arith.constant 0 : i32
    return %c0_i32, %arg0 : i32, i32
  }
  func.func @transform_3(%arg0: i32, %arg1: i32) -> (i32, i32) {
    %c0_i32 = arith.constant 0 : i32
    %c0_i32_0 = arith.constant 0 : i32
    return %c0_i32, %arg0 : i32, i32
  }
  func.func @transform_4(%arg0: i32, %arg1: i32) -> (i32, i32) {
    %c0_i32 = arith.constant 0 : i32
    %c0_i32_0 = arith.constant 0 : i32
    return %c0_i32, %arg0 : i32, i32
  }
  func.func @transform_5(%arg0: i32, %arg1: i32) -> (i32, i32) {
    %c0_i32 = arith.constant 0 : i32
    %c0_i32_0 = arith.constant 0 : i32
    return %c0_i32, %arg0 : i32, i32
  }
}

</mosaic_0001>

<llo_original>
// kernel: tpu_custom_call.1
$region0: #{tpu_custom_call.1}
  #allocation0 [shape = 'u32[]', space=smem, size = 0x4, offset = 0x4, fixed_abs, tag = 'smem constant byte address 0x4 - core index']
  #allocation1 [shape = 'u32[144,128]{1,0:T(1,128)}', space=vmem, size = 0x12000, scoped, tag = 'internal scratch']
  %s0 = inlined_call_operand.hbm [shape: f32[8,256], index: 0, kind: input, shape index: {}]
  %s1 = inlined_call_operand.hbm [shape: bf16[256,128], index: 1, kind: input, shape index: {}]
  %s2 = inlined_call_operand.vmem [shape: f32[1,128], index: 2, kind: input, shape index: {}]
  %s3 = inlined_call_operand.vmem [shape: f32[1,128], index: 3, kind: input, shape index: {}]
  %s4 = inlined_call_operand.vmem [shape: f32[1,128], index: 4, kind: input, shape index: {}]
  %s5 = inlined_call_operand.hbm [shape: f32[8,128], index: 5, kind: output, shape index: {}]
  %s6 = sld [smem:[#allocation0]]
  $region46: #{tpu_custom_call.1} parent=0
    _
  %s8 = ssub.s32 1, %s6
  %s9 = scalar_select 0, %s8, %s6
  $region1: #{tpu_custom_call.1} parent=0
    #allocation2 [shape = 'u8[8192]{0}', space=vmem, size = 0x2000, scoped, tag = 'input window, operand 0, single buffered']
    #allocation3 [shape = 's32[1]{0}', space=sflag, size = 0x4, scoped, tag = 'scoped memory for tpu_custom_call.1']
    #allocation4 [shape = 's32[1]{0}', space=sflag, size = 0x4, scoped, tag = 'scoped memory for tpu_custom_call.1']
    #allocation5 [shape = 'u8[65536]{0}', space=vmem, size = 0x10000, scoped, tag = 'input window, operand 1, single buffered']
    #allocation6 [shape = 's32[1]{0}', space=sflag, size = 0x4, scoped, tag = 'scoped memory for tpu_custom_call.1']
    #allocation7 [shape = 'u8[4096]{0}', space=vmem, size = 0x1000, scoped, tag = 'output window, operand 0, single buffered']
    %10 = vsyncpa [#allocation3], 0
    %11 = vsyncpa [#allocation6], 0
    %12 = vsyncpa [#allocation4], 0
    // Predicated region
    $region2: #{tpu_custom_call.1} parent=1 // pred_check
      _
    $region3: #{tpu_custom_call.1} parent=1 // pred_check_branch
      %14 = sbr.rel (0) target = $region5
    $region4: #{tpu_custom_call.1} parent=1 // pred_region
      %s16 = ssub.s32 256, 256
      %17 = vsyncadd [#allocation3], %s16
      %s19 = sshll.u32 [#allocation2], 4
      %s20 = int_to_ptr.vmem [resolvable:$true] %s19
      %22 = dma.hbm_to_vmem [thread:$0]  %s0, 256, %s20, [#allocation3]
    $region5: #{tpu_custom_call.1} parent=1 // pred_fallthru
      _
    // Predicated region
    $region6: #{tpu_custom_call.1} parent=1 // pred_check
      _
    $region7: #{tpu_custom_call.1} parent=1 // pred_check_branch
      %24 = sbr.rel (0) target = $region9
    $region8: #{tpu_custom_call.1} parent=1 // pred_region
      %s26 = ssub.s32 2048, 2048
      %27 = vsyncadd [#allocation6], %s26
      %s28 = sshll.u32 [#allocation5], 4
      %s29 = int_to_ptr.vmem [resolvable:$true] %s28
      %34 = dma.hbm_to_vmem [thread:$0]  %s1, 2048, %s29, [#allocation6], 64, 64, 4
    $region9: #{tpu_custom_call.1} parent=1 // pred_fallthru
      _
    // Predicated region
    $region10: #{tpu_custom_call.1} parent=1 // pred_check
      _
    $region11: #{tpu_custom_call.1} parent=1 // pred_check_branch
      %36 = sbr.rel (0) target = $region13
    $region12: #{tpu_custom_call.1} parent=1 // pred_region
      _
    $region13: #{tpu_custom_call.1} parent=1 // pred_fallthru
      _
    // Predicated region
    $region14: #{tpu_custom_call.1} parent=1 // pred_check
      _
    $region15: #{tpu_custom_call.1} parent=1 // pred_check_branch
      %38 = sbr.rel (0) target = $region17
    $region16: #{tpu_custom_call.1} parent=1 // pred_region
      _
    $region17: #{tpu_custom_call.1} parent=1 // pred_fallthru
      _
    // Predicated region
    $region18: #{tpu_custom_call.1} parent=1 // pred_check
      _
    $region19: #{tpu_custom_call.1} parent=1 // pred_check_branch
      %40 = sbr.rel (0) target = $region21
    $region20: #{tpu_custom_call.1} parent=1 // pred_region
      _
    $region21: #{tpu_custom_call.1} parent=1 // pred_fallthru
      _
    // Predicated region
    $region22: #{tpu_custom_call.1} parent=1 // pred_check
      _
    $region23: #{tpu_custom_call.1} parent=1 // pred_check_branch
      %42 = sbr.rel (0) target = $region25
    $region24: #{tpu_custom_call.1} parent=1 // pred_region
      %43 = dma.done [#allocation3], 256
    $region25: #{tpu_custom_call.1} parent=1 // pred_fallthru
      _
    // Predicated region
    $region26: #{tpu_custom_call.1} parent=1 // pred_check
      _
    $region27: #{tpu_custom_call.1} parent=1 // pred_check_branch
      %45 = sbr.rel (0) target = $region29
    $region28: #{tpu_custom_call.1} parent=1 // pred_region
      %46 = dma.done [#allocation6], 2048
    $region29: #{tpu_custom_call.1} parent=1 // pred_fallthru
      _
    %p48 = scmp.eq.s32.totalorder 0, 0
    // Predicated region
    $region30: #{tpu_custom_call.1} parent=1 // pred_check
      %p49 = pneg %p48
    $region31: #{tpu_custom_call.1} parent=1 // pred_check_branch
      %51 = sbr.rel (%p49) target = $region33
    $region32: #{tpu_custom_call.1} parent=1 // pred_region
      %52 = vst [vmem:[#allocation7] sm:$0xff] 0.0
    $region33: #{tpu_custom_call.1} parent=1 // pred_fallthru
      _
    %v53 = vld [vmem:[#allocation2] sm:$0xff]
    %v54 = vld [vmem:[#allocation2 + $0x8] sm:$0xff]
    %v55 = vmax.f32 %v53, 0.0
    %v56 = vmax.f32 %v54, 0.0
    %v57 = vpack.c.bf16 %v55, %v55
    %v58 = vpack.c.bf16 %v56, %v56
    %v59 = vld [vmem:[#allocation7] sm:$0xff]
    %v60 = vld [vmem:[#allocation5] sm:$0xf]
    %v61 = vld [vmem:[#allocation5 + $0x4] sm:$0xf]
    %v62 = vld [vmem:[#allocation5 + $0x8] sm:$0xf]
    %v63 = vld [vmem:[#allocation5 + $0xc] sm:$0xf]
    %v64 = vld [vmem:[#allocation5 + $0x10] sm:$0xf]
    %v65 = vld [vmem:[#allocation5 + $0x14] sm:$0xf]
    %v66 = vld [vmem:[#allocation5 + $0x18] sm:$0xf]
    %v67 = vld [vmem:[#allocation5 + $0x1c] sm:$0xf]
    %v68 = vld [vmem:[#allocation5 + $0x20] sm:$0xf]
    %v69 = vld [vmem:[#allocation5 + $0x24] sm:$0xf]
    %v70 = vld [vmem:[#allocation5 + $0x28] sm:$0xf]
    %v71 = vld [vmem:[#allocation5 + $0x2c] sm:$0xf]
    %v72 = vld [vmem:[#allocation5 + $0x30] sm:$0xf]
    %v73 = vld [vmem:[#allocation5 + $0x34] sm:$0xf]
    %v74 = vld [vmem:[#allocation5 + $0x38] sm:$0xf]
    %v75 = vld [vmem:[#allocation5 + $0x3c] sm:$0xf]
    %v76 = vld [vmem:[#allocation5 + $0x40] sm:$0xf]
    %v77 = vld [vmem:[#allocation5 + $0x44] sm:$0xf]
    %v78 = vld [vmem:[#allocation5 + $0x48] sm:$0xf]
    %v79 = vld [vmem:[#allocation5 + $0x4c] sm:$0xf]
    %v80 = vld [vmem:[#allocation5 + $0x50] sm:$0xf]
    %v81 = vld [vmem:[#allocation5 + $0x54] sm:$0xf]
    %v82 = vld [vmem:[#allocation5 + $0x58] sm:$0xf]
    %v83 = vld [vmem:[#allocation5 + $0x5c] sm:$0xf]
    %v84 = vld [vmem:[#allocation5 + $0x60] sm:$0xf]
    %v85 = vld [vmem:[#allocation5 + $0x64] sm:$0xf]
    %v86 = vld [vmem:[#allocation5 + $0x68] sm:$0xf]
    %v87 = vld [vmem:[#allocation5 + $0x6c] sm:$0xf]
    %v88 = vld [vmem:[#allocation5 + $0x70] sm:$0xf]
    %v89 = vld [vmem:[#allocation5 + $0x74] sm:$0xf]
    %v90 = vld [vmem:[#allocation5 + $0x78] sm:$0xf]
    %v91 = vld [vmem:[#allocation5 + $0x7c] sm:$0xf]
    %v124 = vunpack.c.l.b16 %v60
    %v125 = vunpack.c.l.b16 %v61
    %v126 = vunpack.c.l.b16 %v62
    %v127 = vunpack.c.l.b16 %v63
    %v128 = vunpack.c.l.b16 %v64
    %v129 = vunpack.c.l.b16 %v65
    %v130 = vunpack.c.l.b16 %v66
    %v131 = vunpack.c.l.b16 %v67
    %v132 = vunpack.c.l.b16 %v68
    %v133 = vunpack.c.l.b16 %v69
    %v134 = vunpack.c.l.b16 %v70
    %v135 = vunpack.c.l.b16 %v71
    %v136 = vunpack.c.l.b16 %v72
    %v137 = vunpack.c.l.b16 %v73
    %v138 = vunpack.c.l.b16 %v74
    %v139 = vunpack.c.l.b16 %v75
    %v140 = vunpack.c.l.b16 %v76
    %v141 = vunpack.c.l.b16 %v77
    %v142 = vunpack.c.l.b16 %v78
    %v143 = vunpack.c.l.b16 %v79
    %v144 = vunpack.c.l.b16 %v80
    %v145 = vunpack.c.l.b16 %v81
    %v146 = vunpack.c.l.b16 %v82
    %v147 = vunpack.c.l.b16 %v83
    %v148 = vunpack.c.l.b16 %v84
    %v149 = vunpack.c.l.b16 %v85
    %v150 = vunpack.c.l.b16 %v86
    %v151 = vunpack.c.l.b16 %v87
    %v152 = vunpack.c.l.b16 %v88
    %v153 = vunpack.c.l.b16 %v89
    %v154 = vunpack.c.l.b16 %v90
    %v155 = vunpack.c.l.b16 %v91
    %v156 = vpack.c.b16 %v125, %v124
    %v157 = vpack.c.b16 %v127, %v126
    %v158 = vpack.c.b16 %v129, %v128
    %v159 = vpack.c.b16 %v131, %v130
    %v160 = vpack.c.b16 %v133, %v132
    %v161 = vpack.c.b16 %v135, %v134
    %v162 = vpack.c.b16 %v137, %v136
    %v163 = vpack.c.b16 %v139, %v138
    %v164 = vpack.c.b16 %v141, %v140
    %v165 = vpack.c.b16 %v143, %v142
    %v166 = vpack.c.b16 %v145, %v144
    %v167 = vpack.c.b16 %v147, %v146
    %v168 = vpack.c.b16 %v149, %v148
    %v169 = vpack.c.b16 %v151, %v150
    %v170 = vpack.c.b16 %v153, %v152
    %v171 = vpack.c.b16 %v155, %v154
    %188 = vmatprep.subr.bf16.mxu0 0
    %189 = vmatpush1.bf16.msra.mxu0 %v163
    %190 = vmatprep.subr.bf16.mxu0 0
    %191 = vmatpush1.bf16.msra.mxu0 %v162
    %192 = vmatprep.subr.bf16.mxu0 0
    %193 = vmatpush1.bf16.msra.mxu0 %v161
    %194 = vmatprep.subr.bf16.mxu0 0
    %195 = vmatpush1.bf16.msra.mxu0 %v160
    %196 = vmatprep.subr.bf16.mxu0 0
    %197 = vmatpush1.bf16.msra.mxu0 %v159
    %198 = vmatprep.subr.bf16.mxu0 0
    %199 = vmatpush1.bf16.msra.mxu0 %v158
    %200 = vmatprep.subr.bf16.mxu0 0
    %201 = vmatpush1.bf16.msra.mxu0 %v157
    %202 = vmatprep.subr.bf16.mxu0 0
    %203 = vmatpush1.bf16.msra.mxu0 %v156
    %204 = vmatprep.subr.bf16.mxu0 0
    %205 = vmatpush2.bf16.msra.mxu0 %v171
    %206 = vmatprep.subr.bf16.mxu0 0
    %207 = vmatpush2.bf16.msra.mxu0 %v170
    %208 = vmatprep.subr.bf16.mxu0 0
    %209 = vmatpush2.bf16.msra.mxu0 %v169
    %210 = vmatprep.subr.bf16.mxu0 0
    %211 = vmatpush2.bf16.msra.mxu0 %v168
    %212 = vmatprep.subr.bf16.mxu0 0
    %213 = vmatpush2.bf16.msra.mxu0 %v167
    %214 = vmatprep.subr.bf16.mxu0 0
    %215 = vmatpush2.bf16.msra.mxu0 %v166
    %216 = vmatprep.subr.bf16.mxu0 0
    %217 = vmatpush2.bf16.msra.mxu0 %v165
    %218 = vmatprep.subr.bf16.mxu0 0
    %219 = vmatpush2.bf16.msra.mxu0 %v164
    %220 = vmatprep.mubr.bf16.mxu0 %v58
    %221 = vmatmul.mubr.bf16.gmra.mxu0 %v57
    %v222 = vpop.f32.mrf.mxu0
    %v223 = vadd.f32 0.0, %v222
    %v224 = vpop.f32.mrf.mxu0
    %v225 = vpop.f32.mrf.mxu0
    %v226 = vpop.f32.mrf.mxu0
    %227 = vdwg.mxu0
    %v228 = vadd.f32 %v59, %v223
    %229 = vst [vmem:[#allocation7] sm:$0xff] %v228
    // Predicated region
    $region34: #{tpu_custom_call.1} parent=1 // pred_check
      %p230 = pneg %p48
    $region35: #{tpu_custom_call.1} parent=1 // pred_check_branch
      %232 = sbr.rel (%p230) target = $region37
    $region36: #{tpu_custom_call.1} parent=1 // pred_region
      %v233 = vld [vmem:[#allocation7] sm:$0xff]
      %v234 = vld [vmem:[%s2] sm:$0x1]
      %v236 = vlaneseq
      %v237 = vshrl.u32 %v236, 7
      %v238 = vsub.s32 0, %v237
      %v239 = vrot.slane %v234, %v238
      %v241 = vadd.f32 %v233, %v239
      %v242 = vlaneseq
      %v243 = vshrl.u32 %v242, 7
      %vm244 = vcmp.lt.s32.totalorder %v243, 4
      %v245 = vsel %vm244, 1, 0
      %v246 = vcvt.s32.f32 %v245
      %v247 = vmul.f32 %v241, %v246
      %v248 = vrot.slane %v247, 4
      %v249 = vadd.f32 %v247, %v248
      %v250 = vrot.slane %v249, 2
      %v251 = vadd.f32 %v249, %v250
      %v252 = vrot.slane %v251, 1
      %v253 = vadd.f32 %v251, %v252
      %v254 = vmul.f32 %v253, 0.25
      %v255 = vsub.f32 %v241, %v254
      %v256 = vmul.f32 %v255, %v246
      %v257 = vmul.f32 %v256, %v256
      %v258 = vrot.slane %v257, 4
      %v259 = vadd.f32 %v257, %v258
      %v260 = vrot.slane %v259, 2
      %v261 = vadd.f32 %v259, %v260
      %v262 = vrot.slane %v261, 1
      %v263 = vadd.f32 %v261, %v262
      %v264 = vmul.f32 %v263, 0.25
      %v265 = vadd.f32 %v264, 1e-05
      %v266 = vrsqrt.pop %v265
      %v267 = vmul.f32 %v255, %v266
      %v268 = vld [vmem:[%s3] sm:$0x1]
      %v270 = vlaneseq
      %v271 = vshrl.u32 %v270, 7
      %v272 = vsub.s32 0, %v271
      %v273 = vrot.slane %v268, %v272
      %v275 = vmul.f32 %v267, %v273
      %v276 = vld [vmem:[%s4] sm:$0x1]
      %v278 = vlaneseq
      %v279 = vshrl.u32 %v278, 7
      %v280 = vsub.s32 0, %v279
      %v281 = vrot.slane %v276, %v280
      %v283 = vadd.f32 %v275, %v281
      %284 = vst [vmem:[#allocation7] sm:$0xff] %v283
    $region37: #{tpu_custom_call.1} parent=1 // pred_fallthru
      _
    // Predicated region
    $region38: #{tpu_custom_call.1} parent=1 // pred_check
      _
    $region39: #{tpu_custom_call.1} parent=1 // pred_check_branch
      %286 = sbr.rel (0) target = $region41
    $region40: #{tpu_custom_call.1} parent=1 // pred_region
      %s288 = ssub.s32 128, 128
      %289 = vsyncadd [#allocation4], %s288
      %s291 = sshll.u32 [#allocation7], 4
      %s292 = int_to_ptr.vmem [resolvable:$true] %s291
      %294 = dma.vmem_to_hbm [thread:$0]  %s292, 128, %s5, [#allocation4]
    $region41: #{tpu_custom_call.1} parent=1 // pred_fallthru
      _
    // Predicated region
    $region42: #{tpu_custom_call.1} parent=1 // pred_check
      _
    $region43: #{tpu_custom_call.1} parent=1 // pred_check_branch
      %296 = sbr.rel (0) target = $region45
    $region44: #{tpu_custom_call.1} parent=1 // pred_region
      %297 = dma.done [#allocation4], 128
    $region45: #{tpu_custom_call.1} parent=1 // pred_fallthru
      _
    %298 = vsyncpa [#allocation3], 1
    %299 = vsyncpa [#allocation6], 1
    %300 = vsyncpa [#allocation4], 1

</llo_original>
